<compile_context>
chip_gen: v7x
topology: tpu7x:2x2x1
jax: 0.10.0
libtpu: 0.0.40
codegen_flags: <defaults>
</compile_context>

<pallas_src>
import jax
import jax.numpy as jnp
from jax import lax
from jax.experimental import pallas as pl
from jax.experimental.pallas import tpu as pltpu


def _make_kernel(precision):
    def kernel(x_ref, w_ref, b_ref, out_ref, acc_ref):
        # x_ref:   (TB, TK)  compute dtype
        # w_ref:   (TK, 2)   compute dtype (fused conv ⊗ linear weight)
        # b_ref:   (1, 2)    f32 fused bias
        # out_ref: (TB, 2)   x.dtype
        # acc_ref: (TB, 2)   f32 accumulator (persists across K grid steps)
        k = pl.program_id(1)

        @pl.when(k == 0)
        def _():
            acc_ref[...] = jnp.zeros_like(acc_ref)

        acc_ref[...] += jnp.dot(
            x_ref[...], w_ref[...],
            preferred_element_type=jnp.float32,
            precision=precision,
        )

        @pl.when(k == pl.num_programs(1) - 1)
        def _():
            out_ref[...] = (acc_ref[...] + b_ref[...]).astype(out_ref.dtype)

    return kernel


def token_to_coordinate(x, conv_w, conv_b, lin_w, lin_b, *, compute_dtype=None):
    """x: (B, L, C); conv_w: (1, C, 1); conv_b: (1,); lin_w: (2, L); lin_b: (2,).

    compute_dtype: optional streaming dtype (e.g. jnp.bfloat16) — cast once in
    the wrapper; accumulation is always f32. Defaults to x.dtype.
    """
    B, L, C = x.shape
    LC = L * C
    compute_dtype = jnp.dtype(x.dtype if compute_dtype is None else compute_dtype)
    itemsize = compute_dtype.itemsize

    # ---- wrapper-side algebraic fusion (exact) ------------------------------
    wconv = conv_w.reshape(C).astype(jnp.float32)                  # (C,)
    wlin = lin_w.T.astype(jnp.float32)                             # (L, 2)
    # W_fused[l*C + c, j] = wconv[c] * wlin[l, j]   (matches x.reshape(B, L*C))
    w_fused = (wlin[:, None, :] * wconv[None, :, None]).reshape(LC, 2)
    w_fused = w_fused.astype(compute_dtype)
    b_fused = (lin_b.astype(jnp.float32)
               + conv_b.astype(jnp.float32)[0] * wlin.sum(axis=0)).reshape(1, 2)
    x_flat = x.reshape(B, LC).astype(compute_dtype)                # free view if same dtype

    # ---- generation-aware VMEM budgets --------------------------------------
    try:
        phys_vmem = int(pltpu.get_tpu_info().vmem_capacity_bytes)
    except Exception:
        phys_vmem = 64 * 1024 * 1024          # conservative (v7x-sized) fallback
    vmem_limit = (phys_vmem * 3) // 4         # 48 MiB on v7x, 96 MiB on v5e/v6e
    usable = vmem_limit - 4 * 1024 * 1024     # headroom: out/bias/acc + compiler scratch

    # ---- K (reduction) tiling ------------------------------------------------
    # The (tk, 2) weight block is lane-padded to (tk, 128) in VMEM; bound it.
    w_row_bytes = 128 * itemsize
    w_budget = usable // 4
    tk_cap = max(w_budget // (2 * w_row_bytes), 128)   # assume double-buffered weight
    if LC <= tk_cap:
        tk, kn = LC, 1                                  # full-extent K block (always legal)
    else:
        tk = min(32 * 1024, tk_cap)
        tk = max((tk // 128) * 128, 128)
        kn = pl.cdiv(LC, tk)
    w_vmem = 2 * tk * w_row_bytes                       # conservative VMEM accounting

    LC_pad = kn * tk
    if LC_pad != LC:
        # TODO(synk): an L*C that is a multiple of the K tile avoids this
        # materialized zero-pad copy of x (only hit for large, misaligned LC).
        w_fused = jnp.pad(w_fused, ((0, LC_pad - LC), (0, 0)))
        x_flat = jnp.pad(x_flat, ((0, 0), (0, LC_pad - LC)))

    # ---- batch tiling: size by bytes, no row cap -----------------------------
    x_budget = max(usable - w_vmem, 2 * 1024 * 1024)
    tb = x_budget // (2 * tk * itemsize)                # 2 = double-buffered x
    tb = max(tb, 8)
    if tb >= B:
        if B >= 16:
            # Keep >= 2 batch grid steps so both v7x TensorCores get work.
            tb = ((pl.cdiv(B, 2) + 7) // 8) * 8
        else:
            tb = B                                       # full-extent block is legal
    else:
        tb = (tb // 8) * 8                               # (8, 128) sublane constraint
    bn = pl.cdiv(B, tb)

    precision = lax.Precision.HIGHEST if compute_dtype == jnp.float32 else None
    kernel = _make_kernel(precision)

    cost = pl.CostEstimate(
        flops=2 * B * LC * 2,
        transcendentals=0,
        bytes_accessed=(B * LC_pad * itemsize + LC_pad * 2 * itemsize
                        + B * 2 * jnp.dtype(x.dtype).itemsize + 2 * 4),
    )

    def build(single_buffer_invariants):
        def spec(shape, imap, invariant=False):
            if invariant and single_buffer_invariants:
                return pl.BlockSpec(shape, imap, pipeline_mode=pl.Buffered(1))
            return pl.BlockSpec(shape, imap)

        return pl.pallas_call(
            kernel,
            out_shape=jax.ShapeDtypeStruct((B, 2), x.dtype),
            grid=(bn, kn),
            in_specs=[
                pl.BlockSpec((tb, tk), lambda i, k: (i, k)),
                spec((tk, 2), lambda i, k: (k, 0), invariant=(kn == 1)),
                spec((1, 2), lambda i, k: (0, 0), invariant=True),
            ],
            out_specs=pl.BlockSpec((tb, 2), lambda i, k: (i, 0)),
            scratch_shapes=[pltpu.VMEM((tb, 2), jnp.float32)],
            compiler_params=pltpu.CompilerParams(
                dimension_semantics=("parallel", "arbitrary"),
                vmem_limit_bytes=vmem_limit,
            ),
            cost_estimate=cost,
        )

    try:
        return build(True)(x_flat, w_fused, b_fused)
    except Exception:
        # Fallback for JAX versions without single-buffer pipeline_mode support.
        return build(False)(x_flat, w_fused, b_fused)


def _reference(x, conv_w, conv_b, lin_w, lin_b):
    # Pure-JAX replica of the PyTorch forward for validation.
    y = jnp.einsum("blc,c->bl", x, conv_w.reshape(-1)) + conv_b[0]
    return y @ lin_w.T + lin_b


if __name__ == "__main__":
    B, L, C = 2, 16, 4

    key = jax.random.PRNGKey(0)
    kx, kcw, kcb, klw, klb = jax.random.split(key, 5)

    x = jax.random.normal(kx, (B, L, C), dtype=jnp.float32)

    # Parameter shapes per nn.Conv1d(C, 1, 1) and nn.Linear(L, 2).
    conv_w = jax.random.normal(kcw, (1, C, 1), dtype=jnp.float32) * 0.1
    conv_b = jax.random.normal(kcb, (1,), dtype=jnp.float32) * 0.1
    lin_w = jax.random.normal(klw, (2, L), dtype=jnp.float32) * 0.1
    lin_b = jax.random.normal(klb, (2,), dtype=jnp.float32) * 0.1

    out = token_to_coordinate(x, conv_w, conv_b, lin_w, lin_b)
    out = jax.block_until_ready(out)

    ref = _reference(x, conv_w, conv_b, lin_w, lin_b)
    assert out.shape == (B, 2)
    assert jnp.allclose(out, ref, atol=1e-5, rtol=1e-5)

    print("KERNEL_OK")
</pallas_src>

<mosaic_0001>
module attributes {stable_mosaic.version = 11 : i64} {
  func.func @kernel(%arg0: i32, %arg1: i32, %arg2: memref<2x64xf32, #tpu.memory_space<vmem>>, %arg3: memref<64x2xf32, #tpu.memory_space<vmem>>, %arg4: memref<1x2xf32, #tpu.memory_space<vmem>>, %arg5: memref<2x2xf32, #tpu.memory_space<vmem>>, %arg6: memref<2x2xf32, #tpu.memory_space<vmem>>) attributes {dimension_semantics = [#tpu.dimension_semantics<parallel>, #tpu.dimension_semantics<arbitrary>], iteration_bounds = array<i64: 1, 1>, scalar_prefetch = 0 : i64, scratch_operands = 1 : i64, tpu.core_type = #tpu.core_type<tc>, window_params = [{transform_indices = @transform_0, window_bounds = array<i64: 2, 64>}, {pipeline_mode = #tpu.pipeline_mode<synchronous>, transform_indices = @transform_1, window_bounds = array<i64: 64, 2>}, {pipeline_mode = #tpu.pipeline_mode<synchronous>, transform_indices = @transform_2, window_bounds = array<i64: 1, 2>}, {transform_indices = @transform_3, window_bounds = array<i64: 2, 2>}]} {
    %c0_i32 = arith.constant 0 : i32
    %0 = arith.cmpi eq, %arg1, %c0_i32 : i32
    %1 = arith.extui %0 : i1 to i32
    %c0_i32_0 = arith.constant 0 : i32
    %2 = arith.cmpi ne, %1, %c0_i32_0 : i32
    scf.if %2 {
      %cst_10 = arith.constant 0.000000e+00 : f32
      %12 = vector.broadcast %cst_10 : f32 to vector<2x2xf32>
      %c0_11 = arith.constant 0 : index
      %c0_12 = arith.constant 0 : index
      %13 = vector.load %arg6[%c0_11, %c0_12] : memref<2x2xf32, #tpu.memory_space<vmem>>, vector<2x2xf32>
      tpu.vector_store %arg6[%c0_11, %c0_12], %12 {strides = array<i32>} : memref<2x2xf32, #tpu.memory_space<vmem>>, vector<2x2xf32>,
    } else {
    }
    %c0 = arith.constant 0 : index
    %c0_1 = arith.constant 0 : index
    %3 = vector.load %arg6[%c0, %c0_1] : memref<2x2xf32, #tpu.memory_space<vmem>>, vector<2x2xf32>
    %c0_2 = arith.constant 0 : index
    %c0_3 = arith.constant 0 : index
    %4 = vector.load %arg2[%c0_2, %c0_3] : memref<2x64xf32, #tpu.memory_space<vmem>>, vector<2x64xf32>
    %c0_4 = arith.constant 0 : index
    %c0_5 = arith.constant 0 : index
    %5 = vector.load %arg3[%c0_4, %c0_5] : memref<64x2xf32, #tpu.memory_space<vmem>>, vector<64x2xf32>
    %cst = arith.constant dense<0.000000e+00> : vector<2x2xf32>
    %6 = tpu.matmul %4, %5, %cst {dimension_numbers = #tpu.dot_dimension_numbers<[1], [0], [0], [1], [0, 0, 1, 1], [], []>, precision = #tpu.contract_precision<fp32>} : vector<2x64xf32>, vector<64x2xf32>, vector<2x2xf32> -> vector<2x2xf32>
    %7 = arith.addf %3, %6 : vector<2x2xf32>
    %c0_6 = arith.constant 0 : index
    %c0_7 = arith.constant 0 : index
    %8 = vector.load %arg6[%c0_6, %c0_7] : memref<2x2xf32, #tpu.memory_space<vmem>>, vector<2x2xf32>
    tpu.vector_store %arg6[%c0_6, %c0_7], %7 {strides = array<i32>} : memref<2x2xf32, #tpu.memory_space<vmem>>, vector<2x2xf32>,
    %c0_i32_8 = arith.constant 0 : i32
    %9 = arith.cmpi eq, %arg1, %c0_i32_8 : i32
    %10 = arith.extui %9 : i1 to i32
    %c0_i32_9 = arith.constant 0 : i32
    %11 = arith.cmpi ne, %10, %c0_i32_9 : i32
    scf.if %11 {
      %c0_10 = arith.constant 0 : index
      %c0_11 = arith.constant 0 : index
      %12 = vector.load %arg6[%c0_10, %c0_11] : memref<2x2xf32, #tpu.memory_space<vmem>>, vector<2x2xf32>
      %c0_12 = arith.constant 0 : index
      %c0_13 = arith.constant 0 : index
      %13 = vector.load %arg4[%c0_12, %c0_13] : memref<1x2xf32, #tpu.memory_space<vmem>>, vector<1x2xf32>
      %14 = vector.broadcast %13 : vector<1x2xf32> to vector<2x2xf32>
      %15 = arith.addf %12, %14 : vector<2x2xf32>
      %c0_14 = arith.constant 0 : index
      %c0_15 = arith.constant 0 : index
      %16 = vector.load %arg5[%c0_14, %c0_15] : memref<2x2xf32, #tpu.memory_space<vmem>>, vector<2x2xf32>
      tpu.vector_store %arg5[%c0_14, %c0_15], %15 {strides = array<i32>} : memref<2x2xf32, #tpu.memory_space<vmem>>, vector<2x2xf32>,
    } else {
    }
    return
  }
  func.func @transform_0(%arg0: i32, %arg1: i32) -> (i32, i32) {
    %c0_i32 = arith.constant 0 : i32
    return %arg0, %arg1 : i32, i32
  }
  func.func @transform_1(%arg0: i32, %arg1: i32) -> (i32, i32) {
    %c0_i32 = arith.constant 0 : i32
    %c0_i32_0 = arith.constant 0 : i32
    return %arg1, %c0_i32 : i32, i32
  }
  func.func @transform_2(%arg0: i32, %arg1: i32) -> (i32, i32) {
    %c0_i32 = arith.constant 0 : i32
    %c0_i32_0 = arith.constant 0 : i32
    %c0_i32_1 = arith.constant 0 : i32
    return %c0_i32, %c0_i32_0 : i32, i32
  }
  func.func @transform_3(%arg0: i32, %arg1: i32) -> (i32, i32) {
    %c0_i32 = arith.constant 0 : i32
    %c0_i32_0 = arith.constant 0 : i32
    return %arg0, %c0_i32 : i32, i32
  }
}

module attributes {stable_mosaic.version = 11 : i64} {
  func.func @kernel(%arg0: i32, %arg1: i32, %arg2: memref<2x64xf32, #tpu.memory_space<vmem>>, %arg3: memref<64x2xf32, #tpu.memory_space<vmem>>, %arg4: memref<1x2xf32, #tpu.memory_space<vmem>>, %arg5: memref<2x2xf32, #tpu.memory_space<vmem>>, %arg6: memref<2x2xf32, #tpu.memory_space<vmem>>) attributes {dimension_semantics = [#tpu.dimension_semantics<parallel>, #tpu.dimension_semantics<arbitrary>], iteration_bounds = array<i64: 1, 1>, scalar_prefetch = 0 : i64, scratch_operands = 1 : i64, tpu.core_type = #tpu.core_type<tc>, window_params = [{transform_indices = @transform_0, window_bounds = array<i64: 2, 64>}, {transform_indices = @transform_1, window_bounds = array<i64: 64, 2>}, {pipeline_mode = #tpu.pipeline_mode<synchronous>, transform_indices = @transform_2, window_bounds = array<i64: 1, 2>}, {transform_indices = @transform_3, window_bounds = array<i64: 2, 2>}]} {
    %c0_i32 = arith.constant 0 : i32
    %0 = arith.cmpi eq, %arg1, %c0_i32 : i32
    %1 = arith.extui %0 : i1 to i32
    %c0_i32_0 = arith.constant 0 : i32
    %2 = arith.cmpi ne, %1, %c0_i32_0 : i32
    scf.if %2 {
      %cst_10 = arith.constant 0.000000e+00 : f32
      %12 = vector.broadcast %cst_10 : f32 to vector<2x2xf32>
      %c0_11 = arith.constant 0 : index
      %c0_12 = arith.constant 0 : index
      %13 = vector.load %arg6[%c0_11, %c0_12] : memref<2x2xf32, #tpu.memory_space<vmem>>, vector<2x2xf32>
      tpu.vector_store %arg6[%c0_11, %c0_12], %12 {strides = array<i32>} : memref<2x2xf32, #tpu.memory_space<vmem>>, vector<2x2xf32>,
    } else {
    }
    %c0 = arith.constant 0 : index
    %c0_1 = arith.constant 0 : index
    %3 = vector.load %arg6[%c0, %c0_1] : memref<2x2xf32, #tpu.memory_space<vmem>>, vector<2x2xf32>
    %c0_2 = arith.constant 0 : index
    %c0_3 = arith.constant 0 : index
    %4 = vector.load %arg2[%c0_2, %c0_3] : memref<2x64xf32, #tpu.memory_space<vmem>>, vector<2x64xf32>
    %c0_4 = arith.constant 0 : index
    %c0_5 = arith.constant 0 : index
    %5 = vector.load %arg3[%c0_4, %c0_5] : memref<64x2xf32, #tpu.memory_space<vmem>>, vector<64x2xf32>
    %cst = arith.constant dense<0.000000e+00> : vector<2x2xf32>
    %6 = tpu.matmul %4, %5, %cst {dimension_numbers = #tpu.dot_dimension_numbers<[1], [0], [0], [1], [0, 0, 1, 1], [], []>, precision = #tpu.contract_precision<fp32>} : vector<2x64xf32>, vector<64x2xf32>, vector<2x2xf32> -> vector<2x2xf32>
    %7 = arith.addf %3, %6 : vector<2x2xf32>
    %c0_6 = arith.constant 0 : index
    %c0_7 = arith.constant 0 : index
    %8 = vector.load %arg6[%c0_6, %c0_7] : memref<2x2xf32, #tpu.memory_space<vmem>>, vector<2x2xf32>
    tpu.vector_store %arg6[%c0_6, %c0_7], %7 {strides = array<i32>} : memref<2x2xf32, #tpu.memory_space<vmem>>, vector<2x2xf32>,
    %c0_i32_8 = arith.constant 0 : i32
    %9 = arith.cmpi eq, %arg1, %c0_i32_8 : i32
    %10 = arith.extui %9 : i1 to i32
    %c0_i32_9 = arith.constant 0 : i32
    %11 = arith.cmpi ne, %10, %c0_i32_9 : i32
    scf.if %11 {
      %c0_10 = arith.constant 0 : index
      %c0_11 = arith.constant 0 : index
      %12 = vector.load %arg6[%c0_10, %c0_11] : memref<2x2xf32, #tpu.memory_space<vmem>>, vector<2x2xf32>
      %c0_12 = arith.constant 0 : index
      %c0_13 = arith.constant 0 : index
      %13 = vector.load %arg4[%c0_12, %c0_13] : memref<1x2xf32, #tpu.memory_space<vmem>>, vector<1x2xf32>
      %14 = vector.broadcast %13 : vector<1x2xf32> to vector<2x2xf32>
      %15 = arith.addf %12, %14 : vector<2x2xf32>
      %c0_14 = arith.constant 0 : index
      %c0_15 = arith.constant 0 : index
      %16 = vector.load %arg5[%c0_14, %c0_15] : memref<2x2xf32, #tpu.memory_space<vmem>>, vector<2x2xf32>
      tpu.vector_store %arg5[%c0_14, %c0_15], %15 {strides = array<i32>} : memref<2x2xf32, #tpu.memory_space<vmem>>, vector<2x2xf32>,
    } else {
    }
    return
  }
  func.func @transform_0(%arg0: i32, %arg1: i32) -> (i32, i32) {
    %c0_i32 = arith.constant 0 : i32
    return %arg0, %arg1 : i32, i32
  }
  func.func @transform_1(%arg0: i32, %arg1: i32) -> (i32, i32) {
    %c0_i32 = arith.constant 0 : i32
    %c0_i32_0 = arith.constant 0 : i32
    return %arg1, %c0_i32 : i32, i32
  }
  func.func @transform_2(%arg0: i32, %arg1: i32) -> (i32, i32) {
    %c0_i32 = arith.constant 0 : i32
    %c0_i32_0 = arith.constant 0 : i32
    %c0_i32_1 = arith.constant 0 : i32
    return %c0_i32, %c0_i32_0 : i32, i32
  }
  func.func @transform_3(%arg0: i32, %arg1: i32) -> (i32, i32) {
    %c0_i32 = arith.constant 0 : i32
    %c0_i32_0 = arith.constant 0 : i32
    return %arg0, %c0_i32 : i32, i32
  }
}

</mosaic_0001>

<llo_original>
// kernel: tpu_custom_call.1
$region0: #{tpu_custom_call.1}
  #allocation0 [shape = 'u32[]', space=smem, size = 0x4, offset = 0x4, fixed_abs, tag = 'smem constant byte address 0x4 - core index']
  #allocation1 [shape = 'u32[144,128]{1,0:T(1,128)}', space=vmem, size = 0x12000, scoped, tag = 'internal scratch']
  #allocation2 [shape = 'f32[2,2]{1,0:T(2,128)}', space=vmem, size = 0x400, scoped, tag = 'scratch operand']
  %s0 = inlined_call_operand.vmem [shape: f32[2,64], index: 0, kind: input, shape index: {}]
  %s1 = inlined_call_operand.vmem [shape: f32[64,2], index: 1, kind: input, shape index: {}]
  %s2 = inlined_call_operand.vmem [shape: f32[1,2], index: 2, kind: input, shape index: {}]
  %s3 = inlined_call_operand.hbm [shape: f32[2,2], index: 3, kind: output, shape index: {}]
  %s4 = sld [smem:[#allocation0]]
  $region30: #{tpu_custom_call.1} parent=0
    _
  %s6 = ssub.s32 1, %s4
  %s7 = scalar_select 0, %s6, %s4
  $region1: #{tpu_custom_call.1} parent=0
    #allocation3 [shape = 'u8[1024]{0}', space=vmem, size = 0x400, scoped, tag = 'output window, operand 0, single buffered']
    #allocation4 [shape = 's32[1]{0}', space=sflag, size = 0x4, scoped, tag = 'scoped memory for tpu_custom_call.1']
    %8 = vsyncpa [#allocation4], 0
    // Predicated region
    $region2: #{tpu_custom_call.1} parent=1 // pred_check
      _
    $region3: #{tpu_custom_call.1} parent=1 // pred_check_branch
      %10 = sbr.rel (0) target = $region5
    $region4: #{tpu_custom_call.1} parent=1 // pred_region
      _
    $region5: #{tpu_custom_call.1} parent=1 // pred_fallthru
      _
    // Predicated region
    $region6: #{tpu_custom_call.1} parent=1 // pred_check
      _
    $region7: #{tpu_custom_call.1} parent=1 // pred_check_branch
      %12 = sbr.rel (0) target = $region9
    $region8: #{tpu_custom_call.1} parent=1 // pred_region
      _
    $region9: #{tpu_custom_call.1} parent=1 // pred_fallthru
      _
    // Predicated region
    $region10: #{tpu_custom_call.1} parent=1 // pred_check
      _
    $region11: #{tpu_custom_call.1} parent=1 // pred_check_branch
      %14 = sbr.rel (0) target = $region13
    $region12: #{tpu_custom_call.1} parent=1 // pred_region
      _
    $region13: #{tpu_custom_call.1} parent=1 // pred_fallthru
      _
    %p15 = scmp.eq.s32.totalorder 0, 0
    // Predicated region
    $region14: #{tpu_custom_call.1} parent=1 // pred_check
      %p16 = pneg %p15
    $region15: #{tpu_custom_call.1} parent=1 // pred_check_branch
      %18 = sbr.rel (%p16) target = $region17
    $region16: #{tpu_custom_call.1} parent=1 // pred_region
      %vm19 = vcmask 9216
      %20 = vst.msk [vmem:[#allocation2] sm:$0x3] %vm19, 0.0
    $region17: #{tpu_custom_call.1} parent=1 // pred_fallthru
      _
    %v21 = vld [vmem:[#allocation2] sm:$0x3]
    %v22 = vld [vmem:[%s0] sm:$0x3]
    %v23 = vld [vmem:[%s1] sm:$0xff]
    %v24 = vld [vmem:[%s1 + $0x8] sm:$0xff]
    %v25 = vld [vmem:[%s1 + $0x10] sm:$0xff]
    %v26 = vld [vmem:[%s1 + $0x18] sm:$0xff]
    %v27 = vld [vmem:[%s1 + $0x20] sm:$0xff]
    %v28 = vld [vmem:[%s1 + $0x28] sm:$0xff]
    %v29 = vld [vmem:[%s1 + $0x30] sm:$0xff]
    %v30 = vld [vmem:[%s1 + $0x38] sm:$0xff]
    %vm31 = vcmask 523264
    %v33 = vsel %vm31, %v22, 0
    %35 = vmatprep.subr.mxu0 0.0
    %v36 = vand.u32 %v23, 4294901760
    %37 = vmatpush1.msra.mxu0 %v36
    %38 = vmatprep.subr.mxu0 0.0
    %v39 = vand.u32 %v24, 4294901760
    %40 = vmatpush1.msra.mxu0 %v39
    %41 = vmatprep.subr.mxu0 0.0
    %v42 = vand.u32 %v25, 4294901760
    %43 = vmatpush1.msra.mxu0 %v42
    %44 = vmatprep.subr.mxu0 0.0
    %v45 = vand.u32 %v26, 4294901760
    %46 = vmatpush1.msra.mxu0 %v45
    %47 = vmatprep.subr.mxu0 0.0
    %v48 = vand.u32 %v27, 4294901760
    %49 = vmatpush1.msra.mxu0 %v48
    %50 = vmatprep.subr.mxu0 0.0
    %v51 = vand.u32 %v28, 4294901760
    %52 = vmatpush1.msra.mxu0 %v51
    %53 = vmatprep.subr.mxu0 0.0
    %v54 = vand.u32 %v29, 4294901760
    %55 = vmatpush1.msra.mxu0 %v54
    %56 = vmatprep.subr.mxu0 0.0
    %v57 = vand.u32 %v30, 4294901760
    %58 = vmatpush1.msra.mxu0 %v57
    %59 = vmatprep.subr.mxu0 0.0
    %60 = vmatpush1.msra.mxu0 0.0
    %61 = vmatprep.subr.mxu0 0.0
    %62 = vmatpush1.msra.mxu0 0.0
    %63 = vmatprep.subr.mxu0 0.0
    %64 = vmatpush1.msra.mxu0 0.0
    %65 = vmatprep.subr.mxu0 0.0
    %66 = vmatpush1.msra.mxu0 0.0
    %67 = vmatprep.subr.mxu0 0.0
    %68 = vmatpush1.msra.mxu0 0.0
    %69 = vmatprep.subr.mxu0 0.0
    %70 = vmatpush1.msra.mxu0 0.0
    %71 = vmatprep.subr.mxu0 0.0
    %72 = vmatpush1.msra.mxu0 0.0
    %73 = vmatprep.subr.mxu0 0.0
    %74 = vmatpush1.msra.mxu0 0.0
    %75 = vmatprep.subr.mxu0 0.0
    %76 = vmatpush1.msra.mxu0 0.0
    %77 = vmatprep.subr.mxu0 0.0
    %78 = vmatpush1.msra.mxu0 0.0
    %79 = vmatprep.subr.mxu0 0.0
    %80 = vmatpush1.msra.mxu0 0.0
    %81 = vmatprep.subr.mxu0 0.0
    %82 = vmatpush1.msra.mxu0 0.0
    %83 = vmatprep.subr.mxu0 0.0
    %84 = vmatpush1.msra.mxu0 0.0
    %85 = vmatprep.subr.mxu0 0.0
    %86 = vmatpush1.msra.mxu0 0.0
    %87 = vmatprep.subr.mxu0 0.0
    %88 = vmatpush1.msra.mxu0 0.0
    %89 = vmatprep.subr.mxu0 0.0
    %90 = vmatpush1.msra.mxu0 0.0
    %91 = vmatprep.subr.mxu0 0.0
    %92 = vmatpush1.msra.mxu0 0.0
    %93 = vmatprep.subr.mxu0 0.0
    %94 = vmatpush1.msra.mxu0 0.0
    %95 = vmatprep.subr.mxu0 0.0
    %96 = vmatpush1.msra.mxu0 0.0
    %97 = vmatprep.subr.mxu0 0.0
    %98 = vmatpush1.msra.mxu0 0.0
    %99 = vmatprep.subr.mxu0 0.0
    %100 = vmatpush1.msra.mxu0 0.0
    %101 = vmatprep.subr.mxu0 0.0
    %102 = vmatpush1.msra.mxu0 0.0
    %103 = vmatprep.subr.mxu0 0.0
    %104 = vmatpush1.msra.mxu0 0.0
    %105 = vmatprep.subr.mxu0 0.0
    %106 = vmatpush1.msra.mxu0 0.0
    %107 = vmatprep.mubr.f32.mxu0 0.0
    %v108 = vand.u32 %v33, 4294901760
    %v109 = vsub.f32 %v33, %v108
    %v110 = vand.u32 %v109, 4294901760
    %v111 = vsub.f32 %v109, %v110
    %v112 = vand.u32 %v111, 4294901760
    %113 = vmatmul.mubr.f32.gmra.mrb[0].mxu0 %v112
    %v114 = vpop.f32.mrb[0].mxu0
    %v115 = vadd.f32 0.0, %v114
    %v116 = vpop.f32.mrb[0].mxu0
    %117 = vdwg.mxu0
    %118 = vmatprep.subr.mxu0 0.0
    %v119 = vand.u32 %v23, 4294901760
    %v120 = vsub.f32 %v23, %v119
    %v121 = vand.u32 %v120, 4294901760
    %v122 = vsub.f32 %v120, %v121
    %v123 = vand.u32 %v122, 4294901760
    %124 = vmatpush1.msra.mxu0 %v123
    %125 = vmatprep.subr.mxu0 0.0
    %v126 = vand.u32 %v24, 4294901760
    %v127 = vsub.f32 %v24, %v126
    %v128 = vand.u32 %v127, 4294901760
    %v129 = vsub.f32 %v127, %v128
    %v130 = vand.u32 %v129, 4294901760
    %131 = vmatpush1.msra.mxu0 %v130
    %132 = vmatprep.subr.mxu0 0.0
    %v133 = vand.u32 %v25, 4294901760
    %v134 = vsub.f32 %v25, %v133
    %v135 = vand.u32 %v134, 4294901760
    %v136 = vsub.f32 %v134, %v135
    %v137 = vand.u32 %v136, 4294901760
    %138 = vmatpush1.msra.mxu0 %v137
    %139 = vmatprep.subr.mxu0 0.0
    %v140 = vand.u32 %v26, 4294901760
    %v141 = vsub.f32 %v26, %v140
    %v142 = vand.u32 %v141, 4294901760
    %v143 = vsub.f32 %v141, %v142
    %v144 = vand.u32 %v143, 4294901760
    %145 = vmatpush1.msra.mxu0 %v144
    %146 = vmatprep.subr.mxu0 0.0
    %v147 = vand.u32 %v27, 4294901760
    %v148 = vsub.f32 %v27, %v147
    %v149 = vand.u32 %v148, 4294901760
    %v150 = vsub.f32 %v148, %v149
    %v151 = vand.u32 %v150, 4294901760
    %152 = vmatpush1.msra.mxu0 %v151
    %153 = vmatprep.subr.mxu0 0.0
    %v154 = vand.u32 %v28, 4294901760
    %v155 = vsub.f32 %v28, %v154
    %v156 = vand.u32 %v155, 4294901760
    %v157 = vsub.f32 %v155, %v156
    %v158 = vand.u32 %v157, 4294901760
    %159 = vmatpush1.msra.mxu0 %v158
    %160 = vmatprep.subr.mxu0 0.0
    %v161 = vand.u32 %v29, 4294901760
    %v162 = vsub.f32 %v29, %v161
    %v163 = vand.u32 %v162, 4294901760
    %v164 = vsub.f32 %v162, %v163
    %v165 = vand.u32 %v164, 4294901760
    %166 = vmatpush1.msra.mxu0 %v165
    %167 = vmatprep.subr.mxu0 0.0
    %v168 = vand.u32 %v30, 4294901760
    %v169 = vsub.f32 %v30, %v168
    %v170 = vand.u32 %v169, 4294901760
    %v171 = vsub.f32 %v169, %v170
    %v172 = vand.u32 %v171, 4294901760
    %173 = vmatpush1.msra.mxu0 %v172
    %174 = vmatprep.subr.mxu0 0.0
    %175 = vmatpush1.msra.mxu0 0.0
    %176 = vmatprep.subr.mxu0 0.0
    %177 = vmatpush1.msra.mxu0 0.0
    %178 = vmatprep.subr.mxu0 0.0
    %179 = vmatpush1.msra.mxu0 0.0
    %180 = vmatprep.subr.mxu0 0.0
    %181 = vmatpush1.msra.mxu0 0.0
    %182 = vmatprep.subr.mxu0 0.0
    %183 = vmatpush1.msra.mxu0 0.0
    %184 = vmatprep.subr.mxu0 0.0
    %185 = vmatpush1.msra.mxu0 0.0
    %186 = vmatprep.subr.mxu0 0.0
    %187 = vmatpush1.msra.mxu0 0.0
    %188 = vmatprep.subr.mxu0 0.0
    %189 = vmatpush1.msra.mxu0 0.0
    %190 = vmatprep.subr.mxu0 0.0
    %191 = vmatpush1.msra.mxu0 0.0
    %192 = vmatprep.subr.mxu0 0.0
    %193 = vmatpush1.msra.mxu0 0.0
    %194 = vmatprep.subr.mxu0 0.0
    %195 = vmatpush1.msra.mxu0 0.0
    %196 = vmatprep.subr.mxu0 0.0
    %197 = vmatpush1.msra.mxu0 0.0
    %198 = vmatprep.subr.mxu0 0.0
    %199 = vmatpush1.msra.mxu0 0.0
    %200 = vmatprep.subr.mxu0 0.0
    %201 = vmatpush1.msra.mxu0 0.0
    %202 = vmatprep.subr.mxu0 0.0
    %203 = vmatpush1.msra.mxu0 0.0
    %204 = vmatprep.subr.mxu0 0.0
    %205 = vmatpush1.msra.mxu0 0.0
    %206 = vmatprep.subr.mxu0 0.0
    %207 = vmatpush1.msra.mxu0 0.0
    %208 = vmatprep.subr.mxu0 0.0
    %209 = vmatpush1.msra.mxu0 0.0
    %210 = vmatprep.subr.mxu0 0.0
    %211 = vmatpush1.msra.mxu0 0.0
    %212 = vmatprep.subr.mxu0 0.0
    %213 = vmatpush1.msra.mxu0 0.0
    %214 = vmatprep.subr.mxu0 0.0
    %215 = vmatpush1.msra.mxu0 0.0
    %216 = vmatprep.subr.mxu0 0.0
    %217 = vmatpush1.msra.mxu0 0.0
    %218 = vmatprep.subr.mxu0 0.0
    %219 = vmatpush1.msra.mxu0 0.0
    %220 = vmatprep.subr.mxu0 0.0
    %221 = vmatpush1.msra.mxu0 0.0
    %222 = vmatprep.mubr.f32.mxu0 0.0
    %v223 = vand.u32 %v33, 4294901760
    %224 = vmatmul.mubr.f32.gmra.mrb[0].mxu0 %v223
    %v225 = vpop.f32.mrb[0].mxu0
    %v226 = vadd.f32 %v115, %v225
    %v227 = vpop.f32.mrb[0].mxu0
    %228 = vdwg.mxu0
    %229 = vmatprep.subr.mxu0 0.0
    %v230 = vand.u32 %v23, 4294901760
    %v231 = vsub.f32 %v23, %v230
    %232 = vmatpush1.msra.mxu0 %v231
    %233 = vmatprep.subr.mxu0 0.0
    %v234 = vand.u32 %v24, 4294901760
    %v235 = vsub.f32 %v24, %v234
    %236 = vmatpush1.msra.mxu0 %v235
    %237 = vmatprep.subr.mxu0 0.0
    %v238 = vand.u32 %v25, 4294901760
    %v239 = vsub.f32 %v25, %v238
    %240 = vmatpush1.msra.mxu0 %v239
    %241 = vmatprep.subr.mxu0 0.0
    %v242 = vand.u32 %v26, 4294901760
    %v243 = vsub.f32 %v26, %v242
    %244 = vmatpush1.msra.mxu0 %v243
    %245 = vmatprep.subr.mxu0 0.0
    %v246 = vand.u32 %v27, 4294901760
    %v247 = vsub.f32 %v27, %v246
    %248 = vmatpush1.msra.mxu0 %v247
    %249 = vmatprep.subr.mxu0 0.0
    %v250 = vand.u32 %v28, 4294901760
    %v251 = vsub.f32 %v28, %v250
    %252 = vmatpush1.msra.mxu0 %v251
    %253 = vmatprep.subr.mxu0 0.0
    %v254 = vand.u32 %v29, 4294901760
    %v255 = vsub.f32 %v29, %v254
    %256 = vmatpush1.msra.mxu0 %v255
    %257 = vmatprep.subr.mxu0 0.0
    %v258 = vand.u32 %v30, 4294901760
    %v259 = vsub.f32 %v30, %v258
    %260 = vmatpush1.msra.mxu0 %v259
    %261 = vmatprep.subr.mxu0 0.0
    %262 = vmatpush1.msra.mxu0 0.0
    %263 = vmatprep.subr.mxu0 0.0
    %264 = vmatpush1.msra.mxu0 0.0
    %265 = vmatprep.subr.mxu0 0.0
    %266 = vmatpush1.msra.mxu0 0.0
    %267 = vmatprep.subr.mxu0 0.0
    %268 = vmatpush1.msra.mxu0 0.0
    %269 = vmatprep.subr.mxu0 0.0
    %270 = vmatpush1.msra.mxu0 0.0
    %271 = vmatprep.subr.mxu0 0.0
    %272 = vmatpush1.msra.mxu0 0.0
    %273 = vmatprep.subr.mxu0 0.0
    %274 = vmatpush1.msra.mxu0 0.0
    %275 = vmatprep.subr.mxu0 0.0
    %276 = vmatpush1.msra.mxu0 0.0
    %277 = vmatprep.subr.mxu0 0.0
    %278 = vmatpush1.msra.mxu0 0.0
    %279 = vmatprep.subr.mxu0 0.0
    %280 = vmatpush1.msra.mxu0 0.0
    %281 = vmatprep.subr.mxu0 0.0
    %282 = vmatpush1.msra.mxu0 0.0
    %283 = vmatprep.subr.mxu0 0.0
    %284 = vmatpush1.msra.mxu0 0.0
    %285 = vmatprep.subr.mxu0 0.0
    %286 = vmatpush1.msra.mxu0 0.0
    %287 = vmatprep.subr.mxu0 0.0
    %288 = vmatpush1.msra.mxu0 0.0
    %289 = vmatprep.subr.mxu0 0.0
    %290 = vmatpush1.msra.mxu0 0.0
    %291 = vmatprep.subr.mxu0 0.0
    %292 = vmatpush1.msra.mxu0 0.0
    %293 = vmatprep.subr.mxu0 0.0
    %294 = vmatpush1.msra.mxu0 0.0
    %295 = vmatprep.subr.mxu0 0.0
    %296 = vmatpush1.msra.mxu0 0.0
    %297 = vmatprep.subr.mxu0 0.0
    %298 = vmatpush1.msra.mxu0 0.0
    %299 = vmatprep.subr.mxu0 0.0
    %300 = vmatpush1.msra.mxu0 0.0
    %301 = vmatprep.subr.mxu0 0.0
    %302 = vmatpush1.msra.mxu0 0.0
    %303 = vmatprep.subr.mxu0 0.0
    %304 = vmatpush1.msra.mxu0 0.0
    %305 = vmatprep.subr.mxu0 0.0
    %306 = vmatpush1.msra.mxu0 0.0
    %307 = vmatprep.subr.mxu0 0.0
    %308 = vmatpush1.msra.mxu0 0.0
    %309 = vmatprep.mubr.f32.mxu0 0.0
    %v310 = vand.u32 %v33, 4294901760
    %v311 = vsub.f32 %v33, %v310
    %312 = vmatmul.mubr.f32.gmra.mrb[0].mxu0 %v311
    %v313 = vpop.f32.mrb[0].mxu0
    %v314 = vadd.f32 %v226, %v313
    %v315 = vpop.f32.mrb[0].mxu0
    %316 = vdwg.mxu0
    %317 = vmatprep.subr.mxu0 0.0
    %v318 = vand.u32 %v23, 4294901760
    %319 = vmatpush1.msra.mxu0 %v318
    %320 = vmatprep.subr.mxu0 0.0
    %v321 = vand.u32 %v24, 4294901760
    %322 = vmatpush1.msra.mxu0 %v321
    %323 = vmatprep.subr.mxu0 0.0
    %v324 = vand.u32 %v25, 4294901760
    %325 = vmatpush1.msra.mxu0 %v324
    %326 = vmatprep.subr.mxu0 0.0
    %v327 = vand.u32 %v26, 4294901760
    %328 = vmatpush1.msra.mxu0 %v327
    %329 = vmatprep.subr.mxu0 0.0
    %v330 = vand.u32 %v27, 4294901760
    %331 = vmatpush1.msra.mxu0 %v330
    %332 = vmatprep.subr.mxu0 0.0
    %v333 = vand.u32 %v28, 4294901760
    %334 = vmatpush1.msra.mxu0 %v333
    %335 = vmatprep.subr.mxu0 0.0
    %v336 = vand.u32 %v29, 4294901760
    %337 = vmatpush1.msra.mxu0 %v336
    %338 = vmatprep.subr.mxu0 0.0
    %v339 = vand.u32 %v30, 4294901760
    %340 = vmatpush1.msra.mxu0 %v339
    %341 = vmatprep.subr.mxu0 0.0
    %342 = vmatpush1.msra.mxu0 0.0
    %343 = vmatprep.subr.mxu0 0.0
    %344 = vmatpush1.msra.mxu0 0.0
    %345 = vmatprep.subr.mxu0 0.0
    %346 = vmatpush1.msra.mxu0 0.0
    %347 = vmatprep.subr.mxu0 0.0
    %348 = vmatpush1.msra.mxu0 0.0
    %349 = vmatprep.subr.mxu0 0.0
    %350 = vmatpush1.msra.mxu0 0.0
    %351 = vmatprep.subr.mxu0 0.0
    %352 = vmatpush1.msra.mxu0 0.0
    %353 = vmatprep.subr.mxu0 0.0
    %354 = vmatpush1.msra.mxu0 0.0
    %355 = vmatprep.subr.mxu0 0.0
    %356 = vmatpush1.msra.mxu0 0.0
    %357 = vmatprep.subr.mxu0 0.0
    %358 = vmatpush1.msra.mxu0 0.0
    %359 = vmatprep.subr.mxu0 0.0
    %360 = vmatpush1.msra.mxu0 0.0
    %361 = vmatprep.subr.mxu0 0.0
    %362 = vmatpush1.msra.mxu0 0.0
    %363 = vmatprep.subr.mxu0 0.0
    %364 = vmatpush1.msra.mxu0 0.0
    %365 = vmatprep.subr.mxu0 0.0
    %366 = vmatpush1.msra.mxu0 0.0
    %367 = vmatprep.subr.mxu0 0.0
    %368 = vmatpush1.msra.mxu0 0.0
    %369 = vmatprep.subr.mxu0 0.0
    %370 = vmatpush1.msra.mxu0 0.0
    %371 = vmatprep.subr.mxu0 0.0
    %372 = vmatpush1.msra.mxu0 0.0
    %373 = vmatprep.subr.mxu0 0.0
    %374 = vmatpush1.msra.mxu0 0.0
    %375 = vmatprep.subr.mxu0 0.0
    %376 = vmatpush1.msra.mxu0 0.0
    %377 = vmatprep.subr.mxu0 0.0
    %378 = vmatpush1.msra.mxu0 0.0
    %379 = vmatprep.subr.mxu0 0.0
    %380 = vmatpush1.msra.mxu0 0.0
    %381 = vmatprep.subr.mxu0 0.0
    %382 = vmatpush1.msra.mxu0 0.0
    %383 = vmatprep.subr.mxu0 0.0
    %384 = vmatpush1.msra.mxu0 0.0
    %385 = vmatprep.subr.mxu0 0.0
    %386 = vmatpush1.msra.mxu0 0.0
    %387 = vmatprep.subr.mxu0 0.0
    %388 = vmatpush1.msra.mxu0 0.0
    %389 = vmatprep.mubr.f32.mxu0 0.0
    %v390 = vand.u32 %v33, 4294901760
    %v391 = vsub.f32 %v33, %v390
    %v392 = vand.u32 %v391, 4294901760
    %393 = vmatmul.mubr.f32.gmra.mrb[0].mxu0 %v392
    %v394 = vpop.f32.mrb[0].mxu0
    %v395 = vadd.f32 %v314, %v394
    %v396 = vpop.f32.mrb[0].mxu0
    %397 = vdwg.mxu0
    %398 = vmatprep.subr.mxu0 0.0
    %v399 = vand.u32 %v23, 4294901760
    %v400 = vsub.f32 %v23, %v399
    %v401 = vand.u32 %v400, 4294901760
    %402 = vmatpush1.msra.mxu0 %v401
    %403 = vmatprep.subr.mxu0 0.0
    %v404 = vand.u32 %v24, 4294901760
    %v405 = vsub.f32 %v24, %v404
    %v406 = vand.u32 %v405, 4294901760
    %407 = vmatpush1.msra.mxu0 %v406
    %408 = vmatprep.subr.mxu0 0.0
    %v409 = vand.u32 %v25, 4294901760
    %v410 = vsub.f32 %v25, %v409
    %v411 = vand.u32 %v410, 4294901760
    %412 = vmatpush1.msra.mxu0 %v411
    %413 = vmatprep.subr.mxu0 0.0
    %v414 = vand.u32 %v26, 4294901760
    %v415 = vsub.f32 %v26, %v414
    %v416 = vand.u32 %v415, 4294901760
    %417 = vmatpush1.msra.mxu0 %v416
    %418 = vmatprep.subr.mxu0 0.0
    %v419 = vand.u32 %v27, 4294901760
    %v420 = vsub.f32 %v27, %v419
    %v421 = vand.u32 %v420, 4294901760
    %422 = vmatpush1.msra.mxu0 %v421
    %423 = vmatprep.subr.mxu0 0.0
    %v424 = vand.u32 %v28, 4294901760
    %v425 = vsub.f32 %v28, %v424
    %v426 = vand.u32 %v425, 4294901760
    %427 = vmatpush1.msra.mxu0 %v426
    %428 = vmatprep.subr.mxu0 0.0
    %v429 = vand.u32 %v29, 4294901760
    %v430 = vsub.f32 %v29, %v429
    %v431 = vand.u32 %v430, 4294901760
    %432 = vmatpush1.msra.mxu0 %v431
    %433 = vmatprep.subr.mxu0 0.0
    %v434 = vand.u32 %v30, 4294901760
    %v435 = vsub.f32 %v30, %v434
    %v436 = vand.u32 %v435, 4294901760
    %437 = vmatpush1.msra.mxu0 %v436
    %438 = vmatprep.subr.mxu0 0.0
    %439 = vmatpush1.msra.mxu0 0.0
    %440 = vmatprep.subr.mxu0 0.0
    %441 = vmatpush1.msra.mxu0 0.0
    %442 = vmatprep.subr.mxu0 0.0
    %443 = vmatpush1.msra.mxu0 0.0
    %444 = vmatprep.subr.mxu0 0.0
    %445 = vmatpush1.msra.mxu0 0.0
    %446 = vmatprep.subr.mxu0 0.0
    %447 = vmatpush1.msra.mxu0 0.0
    %448 = vmatprep.subr.mxu0 0.0
    %449 = vmatpush1.msra.mxu0 0.0
    %450 = vmatprep.subr.mxu0 0.0
    %451 = vmatpush1.msra.mxu0 0.0
    %452 = vmatprep.subr.mxu0 0.0
    %453 = vmatpush1.msra.mxu0 0.0
    %454 = vmatprep.subr.mxu0 0.0
    %455 = vmatpush1.msra.mxu0 0.0
    %456 = vmatprep.subr.mxu0 0.0
    %457 = vmatpush1.msra.mxu0 0.0
    %458 = vmatprep.subr.mxu0 0.0
    %459 = vmatpush1.msra.mxu0 0.0
    %460 = vmatprep.subr.mxu0 0.0
    %461 = vmatpush1.msra.mxu0 0.0
    %462 = vmatprep.subr.mxu0 0.0
    %463 = vmatpush1.msra.mxu0 0.0
    %464 = vmatprep.subr.mxu0 0.0
    %465 = vmatpush1.msra.mxu0 0.0
    %466 = vmatprep.subr.mxu0 0.0
    %467 = vmatpush1.msra.mxu0 0.0
    %468 = vmatprep.subr.mxu0 0.0
    %469 = vmatpush1.msra.mxu0 0.0
    %470 = vmatprep.subr.mxu0 0.0
    %471 = vmatpush1.msra.mxu0 0.0
    %472 = vmatprep.subr.mxu0 0.0
    %473 = vmatpush1.msra.mxu0 0.0
    %474 = vmatprep.subr.mxu0 0.0
    %475 = vmatpush1.msra.mxu0 0.0
    %476 = vmatprep.subr.mxu0 0.0
    %477 = vmatpush1.msra.mxu0 0.0
    %478 = vmatprep.subr.mxu0 0.0
    %479 = vmatpush1.msra.mxu0 0.0
    %480 = vmatprep.subr.mxu0 0.0
    %481 = vmatpush1.msra.mxu0 0.0
    %482 = vmatprep.subr.mxu0 0.0
    %483 = vmatpush1.msra.mxu0 0.0
    %484 = vmatprep.subr.mxu0 0.0
    %485 = vmatpush1.msra.mxu0 0.0
    %486 = vmatprep.mubr.f32.mxu0 0.0
    %v487 = vand.u32 %v33, 4294901760
    %488 = vmatmul.mubr.f32.gmra.mrb[0].mxu0 %v487
    %v489 = vpop.f32.mrb[0].mxu0
    %v490 = vadd.f32 %v395, %v489
    %v491 = vpop.f32.mrb[0].mxu0
    %492 = vdwg.mxu0
    %493 = vmatprep.subr.mxu0 0.0
    %v494 = vand.u32 %v23, 4294901760
    %495 = vmatpush1.msra.mxu0 %v494
    %496 = vmatprep.subr.mxu0 0.0
    %v497 = vand.u32 %v24, 4294901760
    %498 = vmatpush1.msra.mxu0 %v497
    %499 = vmatprep.subr.mxu0 0.0
    %v500 = vand.u32 %v25, 4294901760
    %501 = vmatpush1.msra.mxu0 %v500
    %502 = vmatprep.subr.mxu0 0.0
    %v503 = vand.u32 %v26, 4294901760
    %504 = vmatpush1.msra.mxu0 %v503
    %505 = vmatprep.subr.mxu0 0.0
    %v506 = vand.u32 %v27, 4294901760
    %507 = vmatpush1.msra.mxu0 %v506
    %508 = vmatprep.subr.mxu0 0.0
    %v509 = vand.u32 %v28, 4294901760
    %510 = vmatpush1.msra.mxu0 %v509
    %511 = vmatprep.subr.mxu0 0.0
    %v512 = vand.u32 %v29, 4294901760
    %513 = vmatpush1.msra.mxu0 %v512
    %514 = vmatprep.subr.mxu0 0.0
    %v515 = vand.u32 %v30, 4294901760
    %516 = vmatpush1.msra.mxu0 %v515
    %517 = vmatprep.subr.mxu0 0.0
    %518 = vmatpush1.msra.mxu0 0.0
    %519 = vmatprep.subr.mxu0 0.0
    %520 = vmatpush1.msra.mxu0 0.0
    %521 = vmatprep.subr.mxu0 0.0
    %522 = vmatpush1.msra.mxu0 0.0
    %523 = vmatprep.subr.mxu0 0.0
    %524 = vmatpush1.msra.mxu0 0.0
    %525 = vmatprep.subr.mxu0 0.0
    %526 = vmatpush1.msra.mxu0 0.0
    %527 = vmatprep.subr.mxu0 0.0
    %528 = vmatpush1.msra.mxu0 0.0
    %529 = vmatprep.subr.mxu0 0.0
    %530 = vmatpush1.msra.mxu0 0.0
    %531 = vmatprep.subr.mxu0 0.0
    %532 = vmatpush1.msra.mxu0 0.0
    %533 = vmatprep.subr.mxu0 0.0
    %534 = vmatpush1.msra.mxu0 0.0
    %535 = vmatprep.subr.mxu0 0.0
    %536 = vmatpush1.msra.mxu0 0.0
    %537 = vmatprep.subr.mxu0 0.0
    %538 = vmatpush1.msra.mxu0 0.0
    %539 = vmatprep.subr.mxu0 0.0
    %540 = vmatpush1.msra.mxu0 0.0
    %541 = vmatprep.subr.mxu0 0.0
    %542 = vmatpush1.msra.mxu0 0.0
    %543 = vmatprep.subr.mxu0 0.0
    %544 = vmatpush1.msra.mxu0 0.0
    %545 = vmatprep.subr.mxu0 0.0
    %546 = vmatpush1.msra.mxu0 0.0
    %547 = vmatprep.subr.mxu0 0.0
    %548 = vmatpush1.msra.mxu0 0.0
    %549 = vmatprep.subr.mxu0 0.0
    %550 = vmatpush1.msra.mxu0 0.0
    %551 = vmatprep.subr.mxu0 0.0
    %552 = vmatpush1.msra.mxu0 0.0
    %553 = vmatprep.subr.mxu0 0.0
    %554 = vmatpush1.msra.mxu0 0.0
    %555 = vmatprep.subr.mxu0 0.0
    %556 = vmatpush1.msra.mxu0 0.0
    %557 = vmatprep.subr.mxu0 0.0
    %558 = vmatpush1.msra.mxu0 0.0
    %559 = vmatprep.subr.mxu0 0.0
    %560 = vmatpush1.msra.mxu0 0.0
    %561 = vmatprep.subr.mxu0 0.0
    %562 = vmatpush1.msra.mxu0 0.0
    %563 = vmatprep.subr.mxu0 0.0
    %564 = vmatpush1.msra.mxu0 0.0
    %565 = vmatprep.mubr.f32.mxu0 0.0
    %v566 = vand.u32 %v33, 4294901760
    %567 = vmatmul.mubr.f32.gmra.mrb[0].mxu0 %v566
    %v568 = vpop.f32.mrb[0].mxu0
    %v569 = vadd.f32 %v490, %v568
    %v570 = vpop.f32.mrb[0].mxu0
    %571 = vdwg.mxu0
    %v572 = vadd.f32 %v21, %v569
    %vm573 = vcmask 9216
    %574 = vst.msk [vmem:[#allocation2] sm:$0x3] %vm573, %v572
    // Predicated region
    $region18: #{tpu_custom_call.1} parent=1 // pred_check
      %p575 = pneg %p15
    $region19: #{tpu_custom_call.1} parent=1 // pred_check_branch
      %577 = sbr.rel (%p575) target = $region21
    $region20: #{tpu_custom_call.1} parent=1 // pred_region
      %v578 = vld [vmem:[#allocation2] sm:$0x3]
      %v579 = vld [vmem:[%s2] sm:$0x1]
      %v581 = vlaneseq
      %v582 = vshrl.u32 %v581, 7
      %v583 = vsub.s32 0, %v582
      %v584 = vrot.slane %v579, %v583
      %v586 = vadd.f32 %v578, %v584
      %587 = vst.msk [vmem:[#allocation3] sm:$0x3] %vm573, %v586
    $region21: #{tpu_custom_call.1} parent=1 // pred_fallthru
      _
    // Predicated region
    $region22: #{tpu_custom_call.1} parent=1 // pred_check
      _
    $region23: #{tpu_custom_call.1} parent=1 // pred_check_branch
      %589 = sbr.rel (0) target = $region25
    $region24: #{tpu_custom_call.1} parent=1 // pred_region
      %s591 = ssub.s32 32, 32
      %592 = vsyncadd [#allocation4], %s591
      %s594 = sshll.u32 [#allocation3], 4
      %s595 = int_to_ptr.vmem [resolvable:$true] %s594
      %597 = dma.vmem_to_hbm [thread:$0]  %s595, 32, %s3, [#allocation4]
    $region25: #{tpu_custom_call.1} parent=1 // pred_fallthru
      _
    // Predicated region
    $region26: #{tpu_custom_call.1} parent=1 // pred_check
      _
    $region27: #{tpu_custom_call.1} parent=1 // pred_check_branch
      %599 = sbr.rel (0) target = $region29
    $region28: #{tpu_custom_call.1} parent=1 // pred_region
      %600 = dma.done [#allocation4], 32
    $region29: #{tpu_custom_call.1} parent=1 // pred_fallthru
      _
    %601 = vsyncpa [#allocation4], 1

// kernel: tpu_custom_call.1
$region0: #{tpu_custom_call.1}
  #allocation0 [shape = 'u32[]', space=smem, size = 0x4, offset = 0x4, fixed_abs, tag = 'smem constant byte address 0x4 - core index']
  #allocation1 [shape = 'u32[144,128]{1,0:T(1,128)}', space=vmem, size = 0x12000, scoped, tag = 'internal scratch']
  #allocation2 [shape = 'f32[2,2]{1,0:T(2,128)}', space=vmem, size = 0x400, scoped, tag = 'scratch operand']
  %s0 = inlined_call_operand.vmem [shape: f32[2,64], index: 0, kind: input, shape index: {}]
  %s1 = inlined_call_operand.vmem [shape: f32[64,2], index: 1, kind: input, shape index: {}]
  %s2 = inlined_call_operand.vmem [shape: f32[1,2], index: 2, kind: input, shape index: {}]
  %s3 = inlined_call_operand.hbm [shape: f32[2,2], index: 3, kind: output, shape index: {}]
  %s4 = sld [smem:[#allocation0]]
  $region30: #{tpu_custom_call.1} parent=0
    _
  %s6 = ssub.s32 1, %s4
  %s7 = scalar_select 0, %s6, %s4
  $region1: #{tpu_custom_call.1} parent=0
    #allocation3 [shape = 'u8[1024]{0}', space=vmem, size = 0x400, scoped, tag = 'output window, operand 0, single buffered']
    #allocation4 [shape = 's32[1]{0}', space=sflag, size = 0x4, scoped, tag = 'scoped memory for tpu_custom_call.1']
    %8 = vsyncpa [#allocation4], 0
    // Predicated region
    $region2: #{tpu_custom_call.1} parent=1 // pred_check
      _
    $region3: #{tpu_custom_call.1} parent=1 // pred_check_branch
      %10 = sbr.rel (0) target = $region5
    $region4: #{tpu_custom_call.1} parent=1 // pred_region
      _
    $region5: #{tpu_custom_call.1} parent=1 // pred_fallthru
      _
    // Predicated region
    $region6: #{tpu_custom_call.1} parent=1 // pred_check
      _
    $region7: #{tpu_custom_call.1} parent=1 // pred_check_branch
      %12 = sbr.rel (0) target = $region9
    $region8: #{tpu_custom_call.1} parent=1 // pred_region
      _
    $region9: #{tpu_custom_call.1} parent=1 // pred_fallthru
      _
    // Predicated region
    $region10: #{tpu_custom_call.1} parent=1 // pred_check
      _
    $region11: #{tpu_custom_call.1} parent=1 // pred_check_branch
      %14 = sbr.rel (0) target = $region13
    $region12: #{tpu_custom_call.1} parent=1 // pred_region
      _
    $region13: #{tpu_custom_call.1} parent=1 // pred_fallthru
      _
    %p15 = scmp.eq.s32.totalorder 0, 0
    // Predicated region
    $region14: #{tpu_custom_call.1} parent=1 // pred_check
      %p16 = pneg %p15
    $region15: #{tpu_custom_call.1} parent=1 // pred_check_branch
      %18 = sbr.rel (%p16) target = $region17
    $region16: #{tpu_custom_call.1} parent=1 // pred_region
      %vm19 = vcmask 9216
      %20 = vst.msk [vmem:[#allocation2] sm:$0x3] %vm19, 0.0
    $region17: #{tpu_custom_call.1} parent=1 // pred_fallthru
      _
    %v21 = vld [vmem:[#allocation2] sm:$0x3]
    %v22 = vld [vmem:[%s0] sm:$0x3]
    %v23 = vld [vmem:[%s1] sm:$0xff]
    %v24 = vld [vmem:[%s1 + $0x8] sm:$0xff]
    %v25 = vld [vmem:[%s1 + $0x10] sm:$0xff]
    %v26 = vld [vmem:[%s1 + $0x18] sm:$0xff]
    %v27 = vld [vmem:[%s1 + $0x20] sm:$0xff]
    %v28 = vld [vmem:[%s1 + $0x28] sm:$0xff]
    %v29 = vld [vmem:[%s1 + $0x30] sm:$0xff]
    %v30 = vld [vmem:[%s1 + $0x38] sm:$0xff]
    %vm31 = vcmask 523264
    %v33 = vsel %vm31, %v22, 0
    %35 = vmatprep.subr.mxu0 0.0
    %v36 = vand.u32 %v23, 4294901760
    %37 = vmatpush1.msra.mxu0 %v36
    %38 = vmatprep.subr.mxu0 0.0
    %v39 = vand.u32 %v24, 4294901760
    %40 = vmatpush1.msra.mxu0 %v39
    %41 = vmatprep.subr.mxu0 0.0
    %v42 = vand.u32 %v25, 4294901760
    %43 = vmatpush1.msra.mxu0 %v42
    %44 = vmatprep.subr.mxu0 0.0
    %v45 = vand.u32 %v26, 4294901760
    %46 = vmatpush1.msra.mxu0 %v45
    %47 = vmatprep.subr.mxu0 0.0
    %v48 = vand.u32 %v27, 4294901760
    %49 = vmatpush1.msra.mxu0 %v48
    %50 = vmatprep.subr.mxu0 0.0
    %v51 = vand.u32 %v28, 4294901760
    %52 = vmatpush1.msra.mxu0 %v51
    %53 = vmatprep.subr.mxu0 0.0
    %v54 = vand.u32 %v29, 4294901760
    %55 = vmatpush1.msra.mxu0 %v54
    %56 = vmatprep.subr.mxu0 0.0
    %v57 = vand.u32 %v30, 4294901760
    %58 = vmatpush1.msra.mxu0 %v57
    %59 = vmatprep.subr.mxu0 0.0
    %60 = vmatpush1.msra.mxu0 0.0
    %61 = vmatprep.subr.mxu0 0.0
    %62 = vmatpush1.msra.mxu0 0.0
    %63 = vmatprep.subr.mxu0 0.0
    %64 = vmatpush1.msra.mxu0 0.0
    %65 = vmatprep.subr.mxu0 0.0
    %66 = vmatpush1.msra.mxu0 0.0
    %67 = vmatprep.subr.mxu0 0.0
    %68 = vmatpush1.msra.mxu0 0.0
    %69 = vmatprep.subr.mxu0 0.0
    %70 = vmatpush1.msra.mxu0 0.0
    %71 = vmatprep.subr.mxu0 0.0
    %72 = vmatpush1.msra.mxu0 0.0
    %73 = vmatprep.subr.mxu0 0.0
    %74 = vmatpush1.msra.mxu0 0.0
    %75 = vmatprep.subr.mxu0 0.0
    %76 = vmatpush1.msra.mxu0 0.0
    %77 = vmatprep.subr.mxu0 0.0
    %78 = vmatpush1.msra.mxu0 0.0
    %79 = vmatprep.subr.mxu0 0.0
    %80 = vmatpush1.msra.mxu0 0.0
    %81 = vmatprep.subr.mxu0 0.0
    %82 = vmatpush1.msra.mxu0 0.0
    %83 = vmatprep.subr.mxu0 0.0
    %84 = vmatpush1.msra.mxu0 0.0
    %85 = vmatprep.subr.mxu0 0.0
    %86 = vmatpush1.msra.mxu0 0.0
    %87 = vmatprep.subr.mxu0 0.0
    %88 = vmatpush1.msra.mxu0 0.0
    %89 = vmatprep.subr.mxu0 0.0
    %90 = vmatpush1.msra.mxu0 0.0
    %91 = vmatprep.subr.mxu0 0.0
    %92 = vmatpush1.msra.mxu0 0.0
    %93 = vmatprep.subr.mxu0 0.0
    %94 = vmatpush1.msra.mxu0 0.0
    %95 = vmatprep.subr.mxu0 0.0
    %96 = vmatpush1.msra.mxu0 0.0
    %97 = vmatprep.subr.mxu0 0.0
    %98 = vmatpush1.msra.mxu0 0.0
    %99 = vmatprep.subr.mxu0 0.0
    %100 = vmatpush1.msra.mxu0 0.0
    %101 = vmatprep.subr.mxu0 0.0
    %102 = vmatpush1.msra.mxu0 0.0
    %103 = vmatprep.subr.mxu0 0.0
    %104 = vmatpush1.msra.mxu0 0.0
    %105 = vmatprep.subr.mxu0 0.0
    %106 = vmatpush1.msra.mxu0 0.0
    %107 = vmatprep.mubr.f32.mxu0 0.0
    %v108 = vand.u32 %v33, 4294901760
    %v109 = vsub.f32 %v33, %v108
    %v110 = vand.u32 %v109, 4294901760
    %v111 = vsub.f32 %v109, %v110
    %v112 = vand.u32 %v111, 4294901760
    %113 = vmatmul.mubr.f32.gmra.mrb[0].mxu0 %v112
    %v114 = vpop.f32.mrb[0].mxu0
    %v115 = vadd.f32 0.0, %v114
    %v116 = vpop.f32.mrb[0].mxu0
    %117 = vdwg.mxu0
    %118 = vmatprep.subr.mxu0 0.0
    %v119 = vand.u32 %v23, 4294901760
    %v120 = vsub.f32 %v23, %v119
    %v121 = vand.u32 %v120, 4294901760
    %v122 = vsub.f32 %v120, %v121
    %v123 = vand.u32 %v122, 4294901760
    %124 = vmatpush1.msra.mxu0 %v123
    %125 = vmatprep.subr.mxu0 0.0
    %v126 = vand.u32 %v24, 4294901760
    %v127 = vsub.f32 %v24, %v126
    %v128 = vand.u32 %v127, 4294901760
    %v129 = vsub.f32 %v127, %v128
    %v130 = vand.u32 %v129, 4294901760
    %131 = vmatpush1.msra.mxu0 %v130
    %132 = vmatprep.subr.mxu0 0.0
    %v133 = vand.u32 %v25, 4294901760
    %v134 = vsub.f32 %v25, %v133
    %v135 = vand.u32 %v134, 4294901760
    %v136 = vsub.f32 %v134, %v135
    %v137 = vand.u32 %v136, 4294901760
    %138 = vmatpush1.msra.mxu0 %v137
    %139 = vmatprep.subr.mxu0 0.0
    %v140 = vand.u32 %v26, 4294901760
    %v141 = vsub.f32 %v26, %v140
    %v142 = vand.u32 %v141, 4294901760
    %v143 = vsub.f32 %v141, %v142
    %v144 = vand.u32 %v143, 4294901760
    %145 = vmatpush1.msra.mxu0 %v144
    %146 = vmatprep.subr.mxu0 0.0
    %v147 = vand.u32 %v27, 4294901760
    %v148 = vsub.f32 %v27, %v147
    %v149 = vand.u32 %v148, 4294901760
    %v150 = vsub.f32 %v148, %v149
    %v151 = vand.u32 %v150, 4294901760
    %152 = vmatpush1.msra.mxu0 %v151
    %153 = vmatprep.subr.mxu0 0.0
    %v154 = vand.u32 %v28, 4294901760
    %v155 = vsub.f32 %v28, %v154
    %v156 = vand.u32 %v155, 4294901760
    %v157 = vsub.f32 %v155, %v156
    %v158 = vand.u32 %v157, 4294901760
    %159 = vmatpush1.msra.mxu0 %v158
    %160 = vmatprep.subr.mxu0 0.0
    %v161 = vand.u32 %v29, 4294901760
    %v162 = vsub.f32 %v29, %v161
    %v163 = vand.u32 %v162, 4294901760
    %v164 = vsub.f32 %v162, %v163
    %v165 = vand.u32 %v164, 4294901760
    %166 = vmatpush1.msra.mxu0 %v165
    %167 = vmatprep.subr.mxu0 0.0
    %v168 = vand.u32 %v30, 4294901760
    %v169 = vsub.f32 %v30, %v168
    %v170 = vand.u32 %v169, 4294901760
    %v171 = vsub.f32 %v169, %v170
    %v172 = vand.u32 %v171, 4294901760
    %173 = vmatpush1.msra.mxu0 %v172
    %174 = vmatprep.subr.mxu0 0.0
    %175 = vmatpush1.msra.mxu0 0.0
    %176 = vmatprep.subr.mxu0 0.0
    %177 = vmatpush1.msra.mxu0 0.0
    %178 = vmatprep.subr.mxu0 0.0
    %179 = vmatpush1.msra.mxu0 0.0
    %180 = vmatprep.subr.mxu0 0.0
    %181 = vmatpush1.msra.mxu0 0.0
    %182 = vmatprep.subr.mxu0 0.0
    %183 = vmatpush1.msra.mxu0 0.0
    %184 = vmatprep.subr.mxu0 0.0
    %185 = vmatpush1.msra.mxu0 0.0
    %186 = vmatprep.subr.mxu0 0.0
    %187 = vmatpush1.msra.mxu0 0.0
    %188 = vmatprep.subr.mxu0 0.0
    %189 = vmatpush1.msra.mxu0 0.0
    %190 = vmatprep.subr.mxu0 0.0
    %191 = vmatpush1.msra.mxu0 0.0
    %192 = vmatprep.subr.mxu0 0.0
    %193 = vmatpush1.msra.mxu0 0.0
    %194 = vmatprep.subr.mxu0 0.0
    %195 = vmatpush1.msra.mxu0 0.0
    %196 = vmatprep.subr.mxu0 0.0
    %197 = vmatpush1.msra.mxu0 0.0
    %198 = vmatprep.subr.mxu0 0.0
    %199 = vmatpush1.msra.mxu0 0.0
    %200 = vmatprep.subr.mxu0 0.0
    %201 = vmatpush1.msra.mxu0 0.0
    %202 = vmatprep.subr.mxu0 0.0
    %203 = vmatpush1.msra.mxu0 0.0
    %204 = vmatprep.subr.mxu0 0.0
    %205 = vmatpush1.msra.mxu0 0.0
    %206 = vmatprep.subr.mxu0 0.0
    %207 = vmatpush1.msra.mxu0 0.0
    %208 = vmatprep.subr.mxu0 0.0
    %209 = vmatpush1.msra.mxu0 0.0
    %210 = vmatprep.subr.mxu0 0.0
    %211 = vmatpush1.msra.mxu0 0.0
    %212 = vmatprep.subr.mxu0 0.0
    %213 = vmatpush1.msra.mxu0 0.0
    %214 = vmatprep.subr.mxu0 0.0
    %215 = vmatpush1.msra.mxu0 0.0
    %216 = vmatprep.subr.mxu0 0.0
    %217 = vmatpush1.msra.mxu0 0.0
    %218 = vmatprep.subr.mxu0 0.0
    %219 = vmatpush1.msra.mxu0 0.0
    %220 = vmatprep.subr.mxu0 0.0
    %221 = vmatpush1.msra.mxu0 0.0
    %222 = vmatprep.mubr.f32.mxu0 0.0
    %v223 = vand.u32 %v33, 4294901760
    %224 = vmatmul.mubr.f32.gmra.mrb[0].mxu0 %v223
    %v225 = vpop.f32.mrb[0].mxu0
    %v226 = vadd.f32 %v115, %v225
    %v227 = vpop.f32.mrb[0].mxu0
    %228 = vdwg.mxu0
    %229 = vmatprep.subr.mxu0 0.0
    %v230 = vand.u32 %v23, 4294901760
    %v231 = vsub.f32 %v23, %v230
    %232 = vmatpush1.msra.mxu0 %v231
    %233 = vmatprep.subr.mxu0 0.0
    %v234 = vand.u32 %v24, 4294901760
    %v235 = vsub.f32 %v24, %v234
    %236 = vmatpush1.msra.mxu0 %v235
    %237 = vmatprep.subr.mxu0 0.0
    %v238 = vand.u32 %v25, 4294901760
    %v239 = vsub.f32 %v25, %v238
    %240 = vmatpush1.msra.mxu0 %v239
    %241 = vmatprep.subr.mxu0 0.0
    %v242 = vand.u32 %v26, 4294901760
    %v243 = vsub.f32 %v26, %v242
    %244 = vmatpush1.msra.mxu0 %v243
    %245 = vmatprep.subr.mxu0 0.0
    %v246 = vand.u32 %v27, 4294901760
    %v247 = vsub.f32 %v27, %v246
    %248 = vmatpush1.msra.mxu0 %v247
    %249 = vmatprep.subr.mxu0 0.0
    %v250 = vand.u32 %v28, 4294901760
    %v251 = vsub.f32 %v28, %v250
    %252 = vmatpush1.msra.mxu0 %v251
    %253 = vmatprep.subr.mxu0 0.0
    %v254 = vand.u32 %v29, 4294901760
    %v255 = vsub.f32 %v29, %v254
    %256 = vmatpush1.msra.mxu0 %v255
    %257 = vmatprep.subr.mxu0 0.0
    %v258 = vand.u32 %v30, 4294901760
    %v259 = vsub.f32 %v30, %v258
    %260 = vmatpush1.msra.mxu0 %v259
    %261 = vmatprep.subr.mxu0 0.0
    %262 = vmatpush1.msra.mxu0 0.0
    %263 = vmatprep.subr.mxu0 0.0
    %264 = vmatpush1.msra.mxu0 0.0
    %265 = vmatprep.subr.mxu0 0.0
    %266 = vmatpush1.msra.mxu0 0.0
    %267 = vmatprep.subr.mxu0 0.0
    %268 = vmatpush1.msra.mxu0 0.0
    %269 = vmatprep.subr.mxu0 0.0
    %270 = vmatpush1.msra.mxu0 0.0
    %271 = vmatprep.subr.mxu0 0.0
    %272 = vmatpush1.msra.mxu0 0.0
    %273 = vmatprep.subr.mxu0 0.0
    %274 = vmatpush1.msra.mxu0 0.0
    %275 = vmatprep.subr.mxu0 0.0
    %276 = vmatpush1.msra.mxu0 0.0
    %277 = vmatprep.subr.mxu0 0.0
    %278 = vmatpush1.msra.mxu0 0.0
    %279 = vmatprep.subr.mxu0 0.0
    %280 = vmatpush1.msra.mxu0 0.0
    %281 = vmatprep.subr.mxu0 0.0
    %282 = vmatpush1.msra.mxu0 0.0
    %283 = vmatprep.subr.mxu0 0.0
    %284 = vmatpush1.msra.mxu0 0.0
    %285 = vmatprep.subr.mxu0 0.0
    %286 = vmatpush1.msra.mxu0 0.0
    %287 = vmatprep.subr.mxu0 0.0
    %288 = vmatpush1.msra.mxu0 0.0
    %289 = vmatprep.subr.mxu0 0.0
    %290 = vmatpush1.msra.mxu0 0.0
    %291 = vmatprep.subr.mxu0 0.0
    %292 = vmatpush1.msra.mxu0 0.0
    %293 = vmatprep.subr.mxu0 0.0
    %294 = vmatpush1.msra.mxu0 0.0
    %295 = vmatprep.subr.mxu0 0.0
    %296 = vmatpush1.msra.mxu0 0.0
    %297 = vmatprep.subr.mxu0 0.0
    %298 = vmatpush1.msra.mxu0 0.0
    %299 = vmatprep.subr.mxu0 0.0
    %300 = vmatpush1.msra.mxu0 0.0
    %301 = vmatprep.subr.mxu0 0.0
    %302 = vmatpush1.msra.mxu0 0.0
    %303 = vmatprep.subr.mxu0 0.0
    %304 = vmatpush1.msra.mxu0 0.0
    %305 = vmatprep.subr.mxu0 0.0
    %306 = vmatpush1.msra.mxu0 0.0
    %307 = vmatprep.subr.mxu0 0.0
    %308 = vmatpush1.msra.mxu0 0.0
    %309 = vmatprep.mubr.f32.mxu0 0.0
    %v310 = vand.u32 %v33, 4294901760
    %v311 = vsub.f32 %v33, %v310
    %312 = vmatmul.mubr.f32.gmra.mrb[0].mxu0 %v311
    %v313 = vpop.f32.mrb[0].mxu0
    %v314 = vadd.f32 %v226, %v313
    %v315 = vpop.f32.mrb[0].mxu0
    %316 = vdwg.mxu0
    %317 = vmatprep.subr.mxu0 0.0
    %v318 = vand.u32 %v23, 4294901760
    %319 = vmatpush1.msra.mxu0 %v318
    %320 = vmatprep.subr.mxu0 0.0
    %v321 = vand.u32 %v24, 4294901760
    %322 = vmatpush1.msra.mxu0 %v321
    %323 = vmatprep.subr.mxu0 0.0
    %v324 = vand.u32 %v25, 4294901760
    %325 = vmatpush1.msra.mxu0 %v324
    %326 = vmatprep.subr.mxu0 0.0
    %v327 = vand.u32 %v26, 4294901760
    %328 = vmatpush1.msra.mxu0 %v327
    %329 = vmatprep.subr.mxu0 0.0
    %v330 = vand.u32 %v27, 4294901760
    %331 = vmatpush1.msra.mxu0 %v330
    %332 = vmatprep.subr.mxu0 0.0
    %v333 = vand.u32 %v28, 4294901760
    %334 = vmatpush1.msra.mxu0 %v333
    %335 = vmatprep.subr.mxu0 0.0
    %v336 = vand.u32 %v29, 4294901760
    %337 = vmatpush1.msra.mxu0 %v336
    %338 = vmatprep.subr.mxu0 0.0
    %v339 = vand.u32 %v30, 4294901760
    %340 = vmatpush1.msra.mxu0 %v339
    %341 = vmatprep.subr.mxu0 0.0
    %342 = vmatpush1.msra.mxu0 0.0
    %343 = vmatprep.subr.mxu0 0.0
    %344 = vmatpush1.msra.mxu0 0.0
    %345 = vmatprep.subr.mxu0 0.0
    %346 = vmatpush1.msra.mxu0 0.0
    %347 = vmatprep.subr.mxu0 0.0
    %348 = vmatpush1.msra.mxu0 0.0
    %349 = vmatprep.subr.mxu0 0.0
    %350 = vmatpush1.msra.mxu0 0.0
    %351 = vmatprep.subr.mxu0 0.0
    %352 = vmatpush1.msra.mxu0 0.0
    %353 = vmatprep.subr.mxu0 0.0
    %354 = vmatpush1.msra.mxu0 0.0
    %355 = vmatprep.subr.mxu0 0.0
    %356 = vmatpush1.msra.mxu0 0.0
    %357 = vmatprep.subr.mxu0 0.0
    %358 = vmatpush1.msra.mxu0 0.0
    %359 = vmatprep.subr.mxu0 0.0
    %360 = vmatpush1.msra.mxu0 0.0
    %361 = vmatprep.subr.mxu0 0.0
    %362 = vmatpush1.msra.mxu0 0.0
    %363 = vmatprep.subr.mxu0 0.0
    %364 = vmatpush1.msra.mxu0 0.0
    %365 = vmatprep.subr.mxu0 0.0
    %366 = vmatpush1.msra.mxu0 0.0
    %367 = vmatprep.subr.mxu0 0.0
    %368 = vmatpush1.msra.mxu0 0.0
    %369 = vmatprep.subr.mxu0 0.0
    %370 = vmatpush1.msra.mxu0 0.0
    %371 = vmatprep.subr.mxu0 0.0
    %372 = vmatpush1.msra.mxu0 0.0
    %373 = vmatprep.subr.mxu0 0.0
    %374 = vmatpush1.msra.mxu0 0.0
    %375 = vmatprep.subr.mxu0 0.0
    %376 = vmatpush1.msra.mxu0 0.0
    %377 = vmatprep.subr.mxu0 0.0
    %378 = vmatpush1.msra.mxu0 0.0
    %379 = vmatprep.subr.mxu0 0.0
    %380 = vmatpush1.msra.mxu0 0.0
    %381 = vmatprep.subr.mxu0 0.0
    %382 = vmatpush1.msra.mxu0 0.0
    %383 = vmatprep.subr.mxu0 0.0
    %384 = vmatpush1.msra.mxu0 0.0
    %385 = vmatprep.subr.mxu0 0.0
    %386 = vmatpush1.msra.mxu0 0.0
    %387 = vmatprep.subr.mxu0 0.0
    %388 = vmatpush1.msra.mxu0 0.0
    %389 = vmatprep.mubr.f32.mxu0 0.0
    %v390 = vand.u32 %v33, 4294901760
    %v391 = vsub.f32 %v33, %v390
    %v392 = vand.u32 %v391, 4294901760
    %393 = vmatmul.mubr.f32.gmra.mrb[0].mxu0 %v392
    %v394 = vpop.f32.mrb[0].mxu0
    %v395 = vadd.f32 %v314, %v394
    %v396 = vpop.f32.mrb[0].mxu0
    %397 = vdwg.mxu0
    %398 = vmatprep.subr.mxu0 0.0
    %v399 = vand.u32 %v23, 4294901760
    %v400 = vsub.f32 %v23, %v399
    %v401 = vand.u32 %v400, 4294901760
    %402 = vmatpush1.msra.mxu0 %v401
    %403 = vmatprep.subr.mxu0 0.0
    %v404 = vand.u32 %v24, 4294901760
    %v405 = vsub.f32 %v24, %v404
    %v406 = vand.u32 %v405, 4294901760
    %407 = vmatpush1.msra.mxu0 %v406
    %408 = vmatprep.subr.mxu0 0.0
    %v409 = vand.u32 %v25, 4294901760
    %v410 = vsub.f32 %v25, %v409
    %v411 = vand.u32 %v410, 4294901760
    %412 = vmatpush1.msra.mxu0 %v411
    %413 = vmatprep.subr.mxu0 0.0
    %v414 = vand.u32 %v26, 4294901760
    %v415 = vsub.f32 %v26, %v414
    %v416 = vand.u32 %v415, 4294901760
    %417 = vmatpush1.msra.mxu0 %v416
    %418 = vmatprep.subr.mxu0 0.0
    %v419 = vand.u32 %v27, 4294901760
    %v420 = vsub.f32 %v27, %v419
    %v421 = vand.u32 %v420, 4294901760
    %422 = vmatpush1.msra.mxu0 %v421
    %423 = vmatprep.subr.mxu0 0.0
    %v424 = vand.u32 %v28, 4294901760
    %v425 = vsub.f32 %v28, %v424
    %v426 = vand.u32 %v425, 4294901760
    %427 = vmatpush1.msra.mxu0 %v426
    %428 = vmatprep.subr.mxu0 0.0
    %v429 = vand.u32 %v29, 4294901760
    %v430 = vsub.f32 %v29, %v429
    %v431 = vand.u32 %v430, 4294901760
    %432 = vmatpush1.msra.mxu0 %v431
    %433 = vmatprep.subr.mxu0 0.0
    %v434 = vand.u32 %v30, 4294901760
    %v435 = vsub.f32 %v30, %v434
    %v436 = vand.u32 %v435, 4294901760
    %437 = vmatpush1.msra.mxu0 %v436
    %438 = vmatprep.subr.mxu0 0.0
    %439 = vmatpush1.msra.mxu0 0.0
    %440 = vmatprep.subr.mxu0 0.0
    %441 = vmatpush1.msra.mxu0 0.0
    %442 = vmatprep.subr.mxu0 0.0
    %443 = vmatpush1.msra.mxu0 0.0
    %444 = vmatprep.subr.mxu0 0.0
    %445 = vmatpush1.msra.mxu0 0.0
    %446 = vmatprep.subr.mxu0 0.0
    %447 = vmatpush1.msra.mxu0 0.0
    %448 = vmatprep.subr.mxu0 0.0
    %449 = vmatpush1.msra.mxu0 0.0
    %450 = vmatprep.subr.mxu0 0.0
    %451 = vmatpush1.msra.mxu0 0.0
    %452 = vmatprep.subr.mxu0 0.0
    %453 = vmatpush1.msra.mxu0 0.0
    %454 = vmatprep.subr.mxu0 0.0
    %455 = vmatpush1.msra.mxu0 0.0
    %456 = vmatprep.subr.mxu0 0.0
    %457 = vmatpush1.msra.mxu0 0.0
    %458 = vmatprep.subr.mxu0 0.0
    %459 = vmatpush1.msra.mxu0 0.0
    %460 = vmatprep.subr.mxu0 0.0
    %461 = vmatpush1.msra.mxu0 0.0
    %462 = vmatprep.subr.mxu0 0.0
    %463 = vmatpush1.msra.mxu0 0.0
    %464 = vmatprep.subr.mxu0 0.0
    %465 = vmatpush1.msra.mxu0 0.0
    %466 = vmatprep.subr.mxu0 0.0
    %467 = vmatpush1.msra.mxu0 0.0
    %468 = vmatprep.subr.mxu0 0.0
    %469 = vmatpush1.msra.mxu0 0.0
    %470 = vmatprep.subr.mxu0 0.0
    %471 = vmatpush1.msra.mxu0 0.0
    %472 = vmatprep.subr.mxu0 0.0
    %473 = vmatpush1.msra.mxu0 0.0
    %474 = vmatprep.subr.mxu0 0.0
    %475 = vmatpush1.msra.mxu0 0.0
    %476 = vmatprep.subr.mxu0 0.0
    %477 = vmatpush1.msra.mxu0 0.0
    %478 = vmatprep.subr.mxu0 0.0
    %479 = vmatpush1.msra.mxu0 0.0
    %480 = vmatprep.subr.mxu0 0.0
    %481 = vmatpush1.msra.mxu0 0.0
    %482 = vmatprep.subr.mxu0 0.0
    %483 = vmatpush1.msra.mxu0 0.0
    %484 = vmatprep.subr.mxu0 0.0
    %485 = vmatpush1.msra.mxu0 0.0
    %486 = vmatprep.mubr.f32.mxu0 0.0
    %v487 = vand.u32 %v33, 4294901760
    %488 = vmatmul.mubr.f32.gmra.mrb[0].mxu0 %v487
    %v489 = vpop.f32.mrb[0].mxu0
    %v490 = vadd.f32 %v395, %v489
    %v491 = vpop.f32.mrb[0].mxu0
    %492 = vdwg.mxu0
    %493 = vmatprep.subr.mxu0 0.0
    %v494 = vand.u32 %v23, 4294901760
    %495 = vmatpush1.msra.mxu0 %v494
    %496 = vmatprep.subr.mxu0 0.0
    %v497 = vand.u32 %v24, 4294901760
    %498 = vmatpush1.msra.mxu0 %v497
    %499 = vmatprep.subr.mxu0 0.0
    %v500 = vand.u32 %v25, 4294901760
    %501 = vmatpush1.msra.mxu0 %v500
    %502 = vmatprep.subr.mxu0 0.0
    %v503 = vand.u32 %v26, 4294901760
    %504 = vmatpush1.msra.mxu0 %v503
    %505 = vmatprep.subr.mxu0 0.0
    %v506 = vand.u32 %v27, 4294901760
    %507 = vmatpush1.msra.mxu0 %v506
    %508 = vmatprep.subr.mxu0 0.0
    %v509 = vand.u32 %v28, 4294901760
    %510 = vmatpush1.msra.mxu0 %v509
    %511 = vmatprep.subr.mxu0 0.0
    %v512 = vand.u32 %v29, 4294901760
    %513 = vmatpush1.msra.mxu0 %v512
    %514 = vmatprep.subr.mxu0 0.0
    %v515 = vand.u32 %v30, 4294901760
    %516 = vmatpush1.msra.mxu0 %v515
    %517 = vmatprep.subr.mxu0 0.0
    %518 = vmatpush1.msra.mxu0 0.0
    %519 = vmatprep.subr.mxu0 0.0
    %520 = vmatpush1.msra.mxu0 0.0
    %521 = vmatprep.subr.mxu0 0.0
    %522 = vmatpush1.msra.mxu0 0.0
    %523 = vmatprep.subr.mxu0 0.0
    %524 = vmatpush1.msra.mxu0 0.0
    %525 = vmatprep.subr.mxu0 0.0
    %526 = vmatpush1.msra.mxu0 0.0
    %527 = vmatprep.subr.mxu0 0.0
    %528 = vmatpush1.msra.mxu0 0.0
    %529 = vmatprep.subr.mxu0 0.0
    %530 = vmatpush1.msra.mxu0 0.0
    %531 = vmatprep.subr.mxu0 0.0
    %532 = vmatpush1.msra.mxu0 0.0
    %533 = vmatprep.subr.mxu0 0.0
    %534 = vmatpush1.msra.mxu0 0.0
    %535 = vmatprep.subr.mxu0 0.0
    %536 = vmatpush1.msra.mxu0 0.0
    %537 = vmatprep.subr.mxu0 0.0
    %538 = vmatpush1.msra.mxu0 0.0
    %539 = vmatprep.subr.mxu0 0.0
    %540 = vmatpush1.msra.mxu0 0.0
    %541 = vmatprep.subr.mxu0 0.0
    %542 = vmatpush1.msra.mxu0 0.0
    %543 = vmatprep.subr.mxu0 0.0
    %544 = vmatpush1.msra.mxu0 0.0
    %545 = vmatprep.subr.mxu0 0.0
    %546 = vmatpush1.msra.mxu0 0.0
    %547 = vmatprep.subr.mxu0 0.0
    %548 = vmatpush1.msra.mxu0 0.0
    %549 = vmatprep.subr.mxu0 0.0
    %550 = vmatpush1.msra.mxu0 0.0
    %551 = vmatprep.subr.mxu0 0.0
    %552 = vmatpush1.msra.mxu0 0.0
    %553 = vmatprep.subr.mxu0 0.0
    %554 = vmatpush1.msra.mxu0 0.0
    %555 = vmatprep.subr.mxu0 0.0
    %556 = vmatpush1.msra.mxu0 0.0
    %557 = vmatprep.subr.mxu0 0.0
    %558 = vmatpush1.msra.mxu0 0.0
    %559 = vmatprep.subr.mxu0 0.0
    %560 = vmatpush1.msra.mxu0 0.0
    %561 = vmatprep.subr.mxu0 0.0
    %562 = vmatpush1.msra.mxu0 0.0
    %563 = vmatprep.subr.mxu0 0.0
    %564 = vmatpush1.msra.mxu0 0.0
    %565 = vmatprep.mubr.f32.mxu0 0.0
    %v566 = vand.u32 %v33, 4294901760
    %567 = vmatmul.mubr.f32.gmra.mrb[0].mxu0 %v566
    %v568 = vpop.f32.mrb[0].mxu0
    %v569 = vadd.f32 %v490, %v568
    %v570 = vpop.f32.mrb[0].mxu0
    %571 = vdwg.mxu0
    %v572 = vadd.f32 %v21, %v569
    %vm573 = vcmask 9216
    %574 = vst.msk [vmem:[#allocation2] sm:$0x3] %vm573, %v572
    // Predicated region
    $region18: #{tpu_custom_call.1} parent=1 // pred_check
      %p575 = pneg %p15
    $region19: #{tpu_custom_call.1} parent=1 // pred_check_branch
      %577 = sbr.rel (%p575) target = $region21
    $region20: #{tpu_custom_call.1} parent=1 // pred_region
      %v578 = vld [vmem:[#allocation2] sm:$0x3]
      %v579 = vld [vmem:[%s2] sm:$0x1]
      %v581 = vlaneseq
      %v582 = vshrl.u32 %v581, 7
      %v583 = vsub.s32 0, %v582
      %v584 = vrot.slane %v579, %v583
      %v586 = vadd.f32 %v578, %v584
      %587 = vst.msk [vmem:[#allocation3] sm:$0x3] %vm573, %v586
    $region21: #{tpu_custom_call.1} parent=1 // pred_fallthru
      _
    // Predicated region
    $region22: #{tpu_custom_call.1} parent=1 // pred_check
      _
    $region23: #{tpu_custom_call.1} parent=1 // pred_check_branch
      %589 = sbr.rel (0) target = $region25
    $region24: #{tpu_custom_call.1} parent=1 // pred_region
      %s591 = ssub.s32 32, 32
      %592 = vsyncadd [#allocation4], %s591
      %s594 = sshll.u32 [#allocation3], 4
      %s595 = int_to_ptr.vmem [resolvable:$true] %s594
      %597 = dma.vmem_to_hbm [thread:$0]  %s595, 32, %s3, [#allocation4]
    $region25: #{tpu_custom_call.1} parent=1 // pred_fallthru
      _
    // Predicated region
    $region26: #{tpu_custom_call.1} parent=1 // pred_check
      _
    $region27: #{tpu_custom_call.1} parent=1 // pred_check_branch
      %599 = sbr.rel (0) target = $region29
    $region28: #{tpu_custom_call.1} parent=1 // pred_region
      %600 = dma.done [#allocation4], 32
    $region29: #{tpu_custom_call.1} parent=1 // pred_fallthru
      _
    %601 = vsyncpa [#allocation4], 1

</llo_original>
